<compile_context>
chip_gen: v7x
topology: tpu7x:2x2x1
jax: 0.10.0
libtpu: 0.0.40
codegen_flags: <defaults>
</compile_context>

<pallas_src>
import functools

import jax
import jax.numpy as jnp
from jax.experimental import pallas as pl
from jax.experimental.pallas import tpu as pltpu

_ALPHA = 0.5          # BinaryFocalLoss(gamma=2, alpha=0.5): at == 0.5 everywhere
_EPS = 1e-12          # guard log(pt) against sigmoid saturation in f32

_ANCHOR_TILE_ROWS = 256   # 256 rows x 128 lanes = 32768 anchors / grid step (~2.5 MiB dbuf)
_IMG_TILE_ROWS = 4096     # 4096 rows x 128 lanes = 512K elements / grid step (~8 MiB dbuf)
_VMEM_LIMIT = 32 * 1024 * 1024   # safe on v5e/v6e/v7x


def _cdiv(a, b):
    return (a + b - 1) // b


def _round_up(x, m):
    return ((x + m - 1) // m) * m


# --------------------------------------------------------------------------- #
# Anchor kernel: focal-loss / smooth-L1 / count lane-partials per tile.        #
# Blocks are channel-major (5, TR, 128): channel 0 = class, 1..4 = regression. #
# --------------------------------------------------------------------------- #
def _anchor_kernel(out_ref, lab_ref, res_ref):
    score = out_ref[0].astype(jnp.float32)          # (TR, 128) fully dense
    t0 = lab_ref[0].astype(jnp.float32)             # (TR, 128)

    pos = t0 > 0.5
    neg = t0 < -0.5
    posf = pos.astype(jnp.float32)
    negf = neg.astype(jnp.float32)

    # sigmoid via EUP exp + approx reciprocal (no multi-op VPU divide)
    prob = pl.reciprocal(1.0 + jnp.exp(-score), approx=True)

    # Positives use target = labels[:,0]; negatives use labels[:,0] + 1.
    # Masks are disjoint, so one fused pt / log(pt).
    tgt = jnp.where(neg, t0 + 1.0, t0)
    pt = prob * tgt + (1.0 - prob) * (1.0 - tgt)
    pt = jnp.where(pos | neg, pt, 1.0)              # ignored / padded anchors -> 0 loss
    pt = jnp.maximum(pt, _EPS)                      # avoid log(0) on saturated logits
    omp = 1.0 - pt
    focal = (-_ALPHA) * omp * omp * jnp.log(pt)     # gamma = 2, at = alpha = 0.5

    # Accuracy counters from the raw logit sign (sigmoid(s) >= 0.5 <=> s >= 0),
    # so the approximate reciprocal cannot shift them.
    pos_ok = (pos & (score >= 0.0)).astype(jnp.float32)
    neg_ok = (neg & (score < 0.0)).astype(jnp.float32)

    # Smooth-L1 (beta = 1) on the 4 regression channels, positives only.
    d = out_ref[1:5].astype(jnp.float32) - lab_ref[1:5].astype(jnp.float32)  # (4,TR,128)
    ad = jnp.abs(d)
    sl1 = jnp.where(ad < 1.0, 0.5 * d * d, ad - 0.5) * posf                  # (4,TR,128)

    # Only sublane-reduce in-kernel (mostly VPU adds); pack the ten (1,128)
    # lane-partials into one aligned (16,128) tile written with a single store.
    def lane_partial(x):                            # (TR,128) -> (1,128)
        return jnp.sum(x, axis=0, keepdims=True)

    res_ref[...] = jnp.concatenate([
        lane_partial(focal * posf),     # row 0: sum_pos_focal
        lane_partial(focal * negf),     # row 1: sum_neg_focal
        lane_partial(posf),             # row 2: n_pos
        lane_partial(negf),             # row 3: n_neg
        jnp.sum(sl1, axis=1),           # rows 4..7: smooth-L1 sums (z, h, w, d)
        lane_partial(pos_ok),           # row 8: pos_correct
        lane_partial(neg_ok),           # row 9: neg_correct
        jnp.zeros((6, 128), jnp.float32),
    ], axis=0)


# --------------------------------------------------------------------------- #
# Reconstruction kernel: per-tile lane-partial of the squared error.           #
# --------------------------------------------------------------------------- #
def _recon_kernel(img_ref, rec_ref, res_ref, *, valid_rows):
    tr = img_ref.shape[0]
    d = rec_ref[...].astype(jnp.float32) - img_ref[...].astype(jnp.float32)
    if valid_rows is not None:
        # Ragged final tile: rows past the end of the array are garbage -> mask.
        row = (pl.program_id(0) * tr
               + jax.lax.broadcasted_iota(jnp.int32, (tr, 128), 0))
        d = jnp.where(row < valid_rows, d, 0.0)
    part = jnp.sum(d * d, axis=0, keepdims=True)          # (1, 128)
    res_ref[...] = jnp.concatenate(
        [part, jnp.zeros((7, 128), jnp.float32)], axis=0)  # aligned (8,128) store


@functools.partial(jax.jit, static_argnames=("recon_loss_scale", "average"))
def focal_loss_forward(output, labels, images, reconstructions,
                       recon_loss_scale=1e-6, average=True):
    """Reproduces FocalLoss(num_hard=0).forward(output, labels, images, recon)."""
    # -------- anchors: (N, 5) -> channel-major dense (5, rows, 128) ----------
    out2 = output.reshape(-1, 5)
    lab2 = labels.reshape(-1, 5)
    n_anchor = out2.shape[0]
    rows = _cdiv(n_anchor, 128)
    tr_a = min(_ANCHOR_TILE_ROWS, _round_up(rows, 8))
    rows_pad = _round_up(rows, tr_a)
    n_pad = rows_pad * 128
    if n_pad != n_anchor:
        # Padded label rows are 0 => neither positive nor negative => no contribution.
        out2 = jnp.pad(out2, ((0, n_pad - n_anchor), (0, 0)))
        lab2 = jnp.pad(lab2, ((0, n_pad - n_anchor), (0, 0)))
    # One fused pad+transpose+reshape relayout pass per array (unavoidable given
    # the (N,5) input layout); everything downstream stays dense.
    out_t = out2.T.reshape(5, rows_pad, 128)
    lab_t = lab2.T.reshape(5, rows_pad, 128)
    grid_a = rows_pad // tr_a

    anchor_partials = pl.pallas_call(
        _anchor_kernel,
        out_shape=jax.ShapeDtypeStruct((grid_a * 16, 128), jnp.float32),
        grid_spec=pltpu.PrefetchScalarGridSpec(
            num_scalar_prefetch=0,
            grid=(grid_a,),
            in_specs=[
                pl.BlockSpec((5, tr_a, 128), lambda i: (0, i, 0)),
                pl.BlockSpec((5, tr_a, 128), lambda i: (0, i, 0)),
            ],
            out_specs=pl.BlockSpec((16, 128), lambda i: (i, 0)),
        ),
        compiler_params=pltpu.CompilerParams(
            dimension_semantics=("parallel",),
            vmem_limit_bytes=_VMEM_LIMIT),
    )(out_t, lab_t)
    # Tiny final reduce (over tiles and lanes) in JAX.
    a_tot = jnp.sum(anchor_partials.reshape(grid_a, 16, 128), axis=(0, 2))  # (16,)

    # -------- reconstruction MSE: no pad copy, free reshape to (rows, 128) ----
    n_img = images.size
    flat_img = images.reshape(-1)
    flat_rec = reconstructions.reshape(-1)
    lane_rem = n_img % 128
    if lane_rem:
        # TODO(synk): sub-lane remainder still needs one small padded copy to form
        #             a (rows, 128) view; masked-in-kernel rows handle the rest.
        flat_img = jnp.pad(flat_img, (0, 128 - lane_rem))
        flat_rec = jnp.pad(flat_rec, (0, 128 - lane_rem))
    rows_r = flat_img.shape[0] // 128
    img2 = flat_img.reshape(rows_r, 128)   # pure reshape: no copy when lane_rem == 0
    rec2 = flat_rec.reshape(rows_r, 128)
    tr_r = min(_IMG_TILE_ROWS, _round_up(rows_r, 8))
    grid_r = _cdiv(rows_r, tr_r)
    valid_rows = None if rows_r % tr_r == 0 else rows_r   # ragged last tile -> mask

    recon_partials = pl.pallas_call(
        functools.partial(_recon_kernel, valid_rows=valid_rows),
        out_shape=jax.ShapeDtypeStruct((grid_r * 8, 128), jnp.float32),
        grid_spec=pltpu.PrefetchScalarGridSpec(
            num_scalar_prefetch=0,
            grid=(grid_r,),
            in_specs=[
                pl.BlockSpec((tr_r, 128), lambda i: (i, 0)),
                pl.BlockSpec((tr_r, 128), lambda i: (i, 0)),
            ],
            out_specs=pl.BlockSpec((8, 128), lambda i: (i, 0)),
        ),
        compiler_params=pltpu.CompilerParams(
            dimension_semantics=("parallel",),
            vmem_limit_bytes=_VMEM_LIMIT),
    )(img2, rec2)
    recon_sq = jnp.sum(recon_partials)

    # -------- tiny scalar glue (matches the PyTorch forward) ------------------
    sum_pos_focal = a_tot[0]
    sum_neg_focal = a_tot[1]
    n_pos = a_tot[2]
    n_neg = a_tot[3]
    r_sums = a_tot[4:8]
    pos_correct = a_tot[8]
    neg_correct = a_tot[9]

    has_pos = n_pos > 0.0
    classify_loss = jnp.where(
        has_pos,
        (sum_pos_focal + sum_neg_focal) / jnp.maximum(n_pos + n_neg, 1.0),
        sum_neg_focal / jnp.maximum(n_neg, 1.0),
    )
    regress = jnp.where(has_pos,
                        r_sums / jnp.maximum(n_pos, 1.0),
                        jnp.zeros((4,), jnp.float32))

    mse = recon_sq / float(n_img) if average else recon_sq
    reconstruction_loss = recon_loss_scale * mse

    loss = classify_loss + jnp.sum(regress) + reconstruction_loss

    return [loss, classify_loss,
            regress[0], regress[1], regress[2], regress[3],
            pos_correct.astype(jnp.int32), n_pos.astype(jnp.int32),
            neg_correct.astype(jnp.int32), n_neg.astype(jnp.int32),
            reconstruction_loss]


if __name__ == "__main__":
    key = jax.random.PRNGKey(0)
    k1, k2, k3, k4, k5 = jax.random.split(key, 5)

    B, A = 2, 32                      # -> N = 64 anchors, each with 5 values
    output = jax.random.normal(k1, (B, A, 5), jnp.float32)

    # class channel in {-1, 0, 1}: negatives / ignored / positives
    cls = (jax.random.randint(k2, (B, A, 1), 0, 3) - 1).astype(jnp.float32)
    reg = jax.random.normal(k3, (B, A, 4), jnp.float32)
    labels = jnp.concatenate([cls, reg], axis=-1)

    images = jax.random.normal(k4, (2, 4, 16, 16), jnp.float32)            # NCHW
    reconstructions = images + 0.1 * jax.random.normal(k5, (2, 4, 16, 16), jnp.float32)

    results = focal_loss_forward(output, labels, images, reconstructions)
    results = jax.block_until_ready(results)

    print("KERNEL_OK")
</pallas_src>

<mosaic_0001>
module attributes {stable_mosaic.version = 11 : i64} {
  func.func @_anchor_kernel(%arg0: i32, %arg1: memref<5x8x128xf32, #tpu.memory_space<vmem>>, %arg2: memref<5x8x128xf32, #tpu.memory_space<vmem>>, %arg3: memref<16x128xf32, #tpu.memory_space<vmem>>) attributes {dimension_semantics = [#tpu.dimension_semantics<parallel>], iteration_bounds = array<i64: 1>, scalar_prefetch = 0 : i64, scratch_operands = 0 : i64, tpu.core_type = #tpu.core_type<tc>, window_params = [{transform_indices = @transform_0, window_bounds = array<i64: 5, 8, 128>}, {transform_indices = @transform_1, window_bounds = array<i64: 5, 8, 128>}, {transform_indices = @transform_2, window_bounds = array<i64: 16, 128>}]} {
    %c0 = arith.constant 0 : index
    %c0_0 = arith.constant 0 : index
    %c0_1 = arith.constant 0 : index
    %0 = vector.load %arg1[%c0, %c0_0, %c0_1] : memref<5x8x128xf32, #tpu.memory_space<vmem>>, vector<1x8x128xf32>
    %1 = vector.shape_cast %0 : vector<1x8x128xf32> to vector<8x128xf32>
    %c0_2 = arith.constant 0 : index
    %c0_3 = arith.constant 0 : index
    %c0_4 = arith.constant 0 : index
    %2 = vector.load %arg2[%c0_2, %c0_3, %c0_4] : memref<5x8x128xf32, #tpu.memory_space<vmem>>, vector<1x8x128xf32>
    %3 = vector.shape_cast %2 : vector<1x8x128xf32> to vector<8x128xf32>
    %cst = arith.constant 5.000000e-01 : f32
    %4 = vector.broadcast %cst : f32 to vector<8x128xf32>
    %5 = arith.cmpf ogt, %3, %4 : vector<8x128xf32>
    %cst_5 = arith.constant -5.000000e-01 : f32
    %6 = vector.broadcast %cst_5 : f32 to vector<8x128xf32>
    %7 = arith.cmpf olt, %3, %6 : vector<8x128xf32>
    %8 = arith.extui %5 : vector<8x128xi1> to vector<8x128xi32>
    %9 = arith.sitofp %8 : vector<8x128xi32> to vector<8x128xf32>
    %10 = arith.extui %7 : vector<8x128xi1> to vector<8x128xi32>
    %11 = arith.sitofp %10 : vector<8x128xi32> to vector<8x128xf32>
    %cst_6 = arith.constant 0.000000e+00 : f32
    %12 = vector.broadcast %cst_6 : f32 to vector<8x128xf32>
    %13 = arith.subf %12, %1 : vector<8x128xf32>
    %14 = math.exp %13 : vector<8x128xf32>
    %cst_7 = arith.constant 1.000000e+00 : f32
    %15 = vector.broadcast %cst_7 : f32 to vector<8x128xf32>
    %16 = arith.addf %15, %14 : vector<8x128xf32>
    %17 = tpu.reciprocal %16 {approx = true} : vector<8x128xf32> -> vector<8x128xf32>
    %cst_8 = arith.constant 1.000000e+00 : f32
    %18 = vector.broadcast %cst_8 : f32 to vector<8x128xf32>
    %19 = arith.addf %3, %18 : vector<8x128xf32>
    %20 = arith.select %7, %19, %3 : vector<8x128xi1>, vector<8x128xf32>
    %21 = arith.mulf %17, %20 : vector<8x128xf32>
    %cst_9 = arith.constant 1.000000e+00 : f32
    %22 = vector.broadcast %cst_9 : f32 to vector<8x128xf32>
    %23 = arith.subf %22, %17 : vector<8x128xf32>
    %cst_10 = arith.constant 1.000000e+00 : f32
    %24 = vector.broadcast %cst_10 : f32 to vector<8x128xf32>
    %25 = arith.subf %24, %20 : vector<8x128xf32>
    %26 = arith.mulf %23, %25 : vector<8x128xf32>
    %27 = arith.addf %21, %26 : vector<8x128xf32>
    %28 = arith.ori %5, %7 : vector<8x128xi1>
    %cst_11 = arith.constant 1.000000e+00 : f32
    %29 = vector.broadcast %cst_11 : f32 to vector<8x128xf32>
    %30 = arith.select %28, %27, %29 : vector<8x128xi1>, vector<8x128xf32>
    %cst_12 = arith.constant 9.99999996E-13 : f32
    %31 = vector.broadcast %cst_12 : f32 to vector<8x128xf32>
    %32 = arith.maximumf %30, %31 : vector<8x128xf32>
    %cst_13 = arith.constant 1.000000e+00 : f32
    %33 = vector.broadcast %cst_13 : f32 to vector<8x128xf32>
    %34 = arith.subf %33, %32 : vector<8x128xf32>
    %cst_14 = arith.constant -5.000000e-01 : f32
    %35 = vector.broadcast %cst_14 : f32 to vector<8x128xf32>
    %36 = arith.mulf %35, %34 : vector<8x128xf32>
    %37 = arith.mulf %36, %34 : vector<8x128xf32>
    %38 = math.log %32 : vector<8x128xf32>
    %39 = arith.mulf %37, %38 : vector<8x128xf32>
    %cst_15 = arith.constant 0.000000e+00 : f32
    %40 = vector.broadcast %cst_15 : f32 to vector<8x128xf32>
    %41 = arith.cmpf oge, %1, %40 : vector<8x128xf32>
    %42 = arith.andi %5, %41 : vector<8x128xi1>
    %43 = arith.extui %42 : vector<8x128xi1> to vector<8x128xi32>
    %44 = arith.sitofp %43 : vector<8x128xi32> to vector<8x128xf32>
    %cst_16 = arith.constant 0.000000e+00 : f32
    %45 = vector.broadcast %cst_16 : f32 to vector<8x128xf32>
    %46 = arith.cmpf olt, %1, %45 : vector<8x128xf32>
    %47 = arith.andi %7, %46 : vector<8x128xi1>
    %48 = arith.extui %47 : vector<8x128xi1> to vector<8x128xi32>
    %49 = arith.sitofp %48 : vector<8x128xi32> to vector<8x128xf32>
    %c1 = arith.constant 1 : index
    %c0_17 = arith.constant 0 : index
    %c0_18 = arith.constant 0 : index
    %50 = vector.load %arg1[%c1, %c0_17, %c0_18] : memref<5x8x128xf32, #tpu.memory_space<vmem>>, vector<4x8x128xf32>
    %c1_19 = arith.constant 1 : index
    %c0_20 = arith.constant 0 : index
    %c0_21 = arith.constant 0 : index
    %51 = vector.load %arg2[%c1_19, %c0_20, %c0_21] : memref<5x8x128xf32, #tpu.memory_space<vmem>>, vector<4x8x128xf32>
    %52 = arith.subf %50, %51 : vector<4x8x128xf32>
    %53 = math.absf %52 : vector<4x8x128xf32>
    %cst_22 = arith.constant 1.000000e+00 : f32
    %54 = vector.broadcast %cst_22 : f32 to vector<4x8x128xf32>
    %55 = arith.cmpf olt, %53, %54 : vector<4x8x128xf32>
    %cst_23 = arith.constant 5.000000e-01 : f32
    %56 = vector.broadcast %cst_23 : f32 to vector<4x8x128xf32>
    %57 = arith.mulf %56, %52 : vector<4x8x128xf32>
    %58 = arith.mulf %57, %52 : vector<4x8x128xf32>
    %cst_24 = arith.constant 5.000000e-01 : f32
    %59 = vector.broadcast %cst_24 : f32 to vector<4x8x128xf32>
    %60 = arith.subf %53, %59 : vector<4x8x128xf32>
    %61 = arith.select %55, %58, %60 : vector<4x8x128xi1>, vector<4x8x128xf32>
    %62 = vector.shape_cast %9 : vector<8x128xf32> to vector<1x8x128xf32>
    %63 = vector.broadcast %62 : vector<1x8x128xf32> to vector<4x8x128xf32>
    %64 = arith.mulf %61, %63 : vector<4x8x128xf32>
    %65 = arith.mulf %39, %9 : vector<8x128xf32>
    %cst_25 = arith.constant dense<0.000000e+00> : vector<128xf32>
    %66 = vector.multi_reduction <add>, %65, %cst_25 [0] : vector<8x128xf32> to vector<128xf32>
    %67 = vector.shape_cast %66 : vector<128xf32> to vector<1x128xf32>
    %68 = arith.mulf %39, %11 : vector<8x128xf32>
    %cst_26 = arith.constant dense<0.000000e+00> : vector<128xf32>
    %69 = vector.multi_reduction <add>, %68, %cst_26 [0] : vector<8x128xf32> to vector<128xf32>
    %70 = vector.shape_cast %69 : vector<128xf32> to vector<1x128xf32>
    %cst_27 = arith.constant dense<0.000000e+00> : vector<128xf32>
    %71 = vector.multi_reduction <add>, %9, %cst_27 [0] : vector<8x128xf32> to vector<128xf32>
    %72 = vector.shape_cast %71 : vector<128xf32> to vector<1x128xf32>
    %cst_28 = arith.constant dense<0.000000e+00> : vector<128xf32>
    %73 = vector.multi_reduction <add>, %11, %cst_28 [0] : vector<8x128xf32> to vector<128xf32>
    %74 = vector.shape_cast %73 : vector<128xf32> to vector<1x128xf32>
    %cst_29 = arith.constant dense<0.000000e+00> : vector<4x128xf32>
    %75 = vector.multi_reduction <add>, %64, %cst_29 [1] : vector<4x8x128xf32> to vector<4x128xf32>
    %cst_30 = arith.constant dense<0.000000e+00> : vector<128xf32>
    %76 = vector.multi_reduction <add>, %44, %cst_30 [0] : vector<8x128xf32> to vector<128xf32>
    %77 = vector.shape_cast %76 : vector<128xf32> to vector<1x128xf32>
    %cst_31 = arith.constant dense<0.000000e+00> : vector<128xf32>
    %78 = vector.multi_reduction <add>, %49, %cst_31 [0] : vector<8x128xf32> to vector<128xf32>
    %79 = vector.shape_cast %78 : vector<128xf32> to vector<1x128xf32>
    %cst_32 = arith.constant 0.000000e+00 : f32
    %80 = vector.broadcast %cst_32 : f32 to vector<6x128xf32>
    %81 = tpu.concatenate %67, %70, %72, %74, %75, %77, %79, %80 in 0 : vector<1x128xf32>, vector<1x128xf32>, vector<1x128xf32>, vector<1x128xf32>, vector<4x128xf32>, vector<1x128xf32>, vector<1x128xf32>, vector<6x128xf32> -> vector<16x128xf32>
    %c0_33 = arith.constant 0 : index
    %c0_34 = arith.constant 0 : index
    %82 = vector.load %arg3[%c0_33, %c0_34] : memref<16x128xf32, #tpu.memory_space<vmem>>, vector<16x128xf32>
    tpu.vector_store %arg3[%c0_33, %c0_34], %81 {strides = array<i32>} : memref<16x128xf32, #tpu.memory_space<vmem>>, vector<16x128xf32>,
    return
  }
  func.func @transform_0(%arg0: i32) -> (i32, i32, i32) {
    %c0_i32 = arith.constant 0 : i32
    %c0_i32_0 = arith.constant 0 : i32
    %c0_i32_1 = arith.constant 0 : i32
    return %c0_i32, %arg0, %c0_i32_0 : i32, i32, i32
  }
  func.func @transform_1(%arg0: i32) -> (i32, i32, i32) {
    %c0_i32 = arith.constant 0 : i32
    %c0_i32_0 = arith.constant 0 : i32
    %c0_i32_1 = arith.constant 0 : i32
    return %c0_i32, %arg0, %c0_i32_0 : i32, i32, i32
  }
  func.func @transform_2(%arg0: i32) -> (i32, i32) {
    %c0_i32 = arith.constant 0 : i32
    %c0_i32_0 = arith.constant 0 : i32
    return %arg0, %c0_i32 : i32, i32
  }
}

module attributes {stable_mosaic.version = 11 : i64} {
  func.func @_recon_kernel(%arg0: i32, %arg1: memref<16x128xf32, #tpu.memory_space<vmem>>, %arg2: memref<16x128xf32, #tpu.memory_space<vmem>>, %arg3: memref<8x128xf32, #tpu.memory_space<vmem>>) attributes {dimension_semantics = [#tpu.dimension_semantics<parallel>], iteration_bounds = array<i64: 1>, scalar_prefetch = 0 : i64, scratch_operands = 0 : i64, tpu.core_type = #tpu.core_type<tc>, window_params = [{transform_indices = @transform_0, window_bounds = array<i64: 16, 128>}, {transform_indices = @transform_1, window_bounds = array<i64: 16, 128>}, {transform_indices = @transform_2, window_bounds = array<i64: 8, 128>}]} {
    %c0 = arith.constant 0 : index
    %c0_0 = arith.constant 0 : index
    %0 = vector.load %arg2[%c0, %c0_0] : memref<16x128xf32, #tpu.memory_space<vmem>>, vector<16x128xf32>
    %c0_1 = arith.constant 0 : index
    %c0_2 = arith.constant 0 : index
    %1 = vector.load %arg1[%c0_1, %c0_2] : memref<16x128xf32, #tpu.memory_space<vmem>>, vector<16x128xf32>
    %2 = arith.subf %0, %1 : vector<16x128xf32>
    %3 = arith.mulf %2, %2 : vector<16x128xf32>
    %cst = arith.constant dense<0.000000e+00> : vector<128xf32>
    %4 = vector.multi_reduction <add>, %3, %cst [0] : vector<16x128xf32> to vector<128xf32>
    %5 = vector.shape_cast %4 : vector<128xf32> to vector<1x128xf32>
    %cst_3 = arith.constant 0.000000e+00 : f32
    %6 = vector.broadcast %cst_3 : f32 to vector<7x128xf32>
    %7 = tpu.concatenate %5, %6 in 0 : vector<1x128xf32>, vector<7x128xf32> -> vector<8x128xf32>
    %c0_4 = arith.constant 0 : index
    %c0_5 = arith.constant 0 : index
    %8 = vector.load %arg3[%c0_4, %c0_5] : memref<8x128xf32, #tpu.memory_space<vmem>>, vector<8x128xf32>
    tpu.vector_store %arg3[%c0_4, %c0_5], %7 {strides = array<i32>} : memref<8x128xf32, #tpu.memory_space<vmem>>, vector<8x128xf32>,
    return
  }
  func.func @transform_0(%arg0: i32) -> (i32, i32) {
    %c0_i32 = arith.constant 0 : i32
    %c0_i32_0 = arith.constant 0 : i32
    return %arg0, %c0_i32 : i32, i32
  }
  func.func @transform_1(%arg0: i32) -> (i32, i32) {
    %c0_i32 = arith.constant 0 : i32
    %c0_i32_0 = arith.constant 0 : i32
    return %arg0, %c0_i32 : i32, i32
  }
  func.func @transform_2(%arg0: i32) -> (i32, i32) {
    %c0_i32 = arith.constant 0 : i32
    %c0_i32_0 = arith.constant 0 : i32
    return %arg0, %c0_i32 : i32, i32
  }
}

</mosaic_0001>

<llo_original>
// kernel: focal_loss_forward.2
$region0: #{focal_loss_forward.2}
  #allocation0 [shape = 'u32[]', space=smem, size = 0x4, offset = 0x4, fixed_abs, tag = 'smem constant byte address 0x4 - core index']
  #allocation1 [shape = 'u32[144,128]{1,0:T(1,128)}', space=vmem, size = 0x12000, scoped, tag = 'internal scratch']
  %s0 = inlined_call_operand.vmem [shape: f32[5,8,128], index: 0, kind: input, shape index: {}]
  %s1 = inlined_call_operand.vmem [shape: f32[5,8,128], index: 1, kind: input, shape index: {}]
  %s2 = inlined_call_operand.vmem [shape: f32[16,128], index: 2, kind: output, shape index: {}]
  %s3 = sld [smem:[#allocation0]]
  $region18: #{focal_loss_forward.2} parent=0
    _
  %s5 = ssub.s32 1, %s3
  %s6 = scalar_select 0, %s5, %s3
  // Predicated region
  $region2: #{focal_loss_forward.2} parent=0 // pred_check
    _
  $region3: #{focal_loss_forward.2} parent=0 // pred_check_branch
    %8 = sbr.rel (0) target = $region5
  $region4: #{focal_loss_forward.2} parent=0 // pred_region
    _
  $region5: #{focal_loss_forward.2} parent=0 // pred_fallthru
    _
  // Predicated region
  $region6: #{focal_loss_forward.2} parent=0 // pred_check
    _
  $region7: #{focal_loss_forward.2} parent=0 // pred_check_branch
    %10 = sbr.rel (0) target = $region9
  $region8: #{focal_loss_forward.2} parent=0 // pred_region
    _
  $region9: #{focal_loss_forward.2} parent=0 // pred_fallthru
    _
  %v11 = vld [vmem:[%s0] sm:$0xff]
  %v12 = vld [vmem:[%s1] sm:$0xff]
  %vm13 = vcmp.gt.f32.partialorder %v12, 0.5
  %vm14 = vcmp.lt.f32.partialorder %v12, -0.5
  %v15 = vsel %vm13, 1, 0
  %v16 = vcvt.s32.f32 %v15
  %v17 = vsel %vm14, 1, 0
  %v18 = vcvt.s32.f32 %v17
  %v19 = vsub.f32 0.0, %v11
  %v20 = vmul.f32 %v19, 1.442695
  %v21 = vpow.pop %v20
  %v22 = vadd.f32 %v21, 1.0
  %v23 = vrcp.pop %v22
  %v24 = vadd.f32 %v12, 1.0
  %v25 = vsel %vm14, %v24, %v12
  %v26 = vmul.f32 %v23, %v25
  %v27 = vsub.f32 1.0, %v23
  %v28 = vsub.f32 1.0, %v25
  %v29 = vmul.f32 %v27, %v28
  %v30 = vadd.f32 %v26, %v29
  %vm31 = vmor %vm13, %vm14
  %v32 = vsel %vm31, %v30, 1.0
  %v33 = vmax.f32 %v32, 1e-12
  %v34 = vsub.f32 1.0, %v33
  %v35 = vmul.f32 %v34, -0.5
  %v36 = vmul.f32 %v35, %v34
  %v37 = vlog2.pop %v33
  %v38 = vmul.f32 %v37, 0.6931472
  %v39 = vmul.f32 %v36, %v38
  %vm40 = vcmp.ge.f32.partialorder %v11, 0.0
  %vm41 = vmand %vm13, %vm40
  %v42 = vsel %vm41, 1, 0
  %v43 = vcvt.s32.f32 %v42
  %vm44 = vcmp.lt.f32.partialorder %v11, 0.0
  %vm45 = vmand %vm14, %vm44
  %v46 = vsel %vm45, 1, 0
  %v47 = vcvt.s32.f32 %v46
  %s48 = scalar_lea.vmem %s0, 8
  %v49 = vld [vmem:[%s48] sm:$0xff]
  %v50 = vld [vmem:[%s48 + $0x8] sm:$0xff]
  %v51 = vld [vmem:[%s48 + $0x10] sm:$0xff]
  %v52 = vld [vmem:[%s48 + $0x18] sm:$0xff]
  %s53 = scalar_lea.vmem %s1, 8
  %v54 = vld [vmem:[%s53] sm:$0xff]
  %v55 = vld [vmem:[%s53 + $0x8] sm:$0xff]
  %v56 = vld [vmem:[%s53 + $0x10] sm:$0xff]
  %v57 = vld [vmem:[%s53 + $0x18] sm:$0xff]
  %v58 = vsub.f32 %v49, %v54
  %v59 = vsub.f32 %v50, %v55
  %v60 = vsub.f32 %v51, %v56
  %v61 = vsub.f32 %v52, %v57
  %v62 = vand.u32 2147483647, %v58
  %v63 = vand.u32 2147483647, %v59
  %v64 = vand.u32 2147483647, %v60
  %v65 = vand.u32 2147483647, %v61
  %vm66 = vcmp.lt.f32.partialorder %v62, 1.0
  %vm67 = vcmp.lt.f32.partialorder %v63, 1.0
  %vm68 = vcmp.lt.f32.partialorder %v64, 1.0
  %vm69 = vcmp.lt.f32.partialorder %v65, 1.0
  %v70 = vmul.f32 %v58, 0.5
  %v71 = vmul.f32 %v59, 0.5
  %v72 = vmul.f32 %v60, 0.5
  %v73 = vmul.f32 %v61, 0.5
  %v74 = vmul.f32 %v70, %v58
  %v75 = vmul.f32 %v71, %v59
  %v76 = vmul.f32 %v72, %v60
  %v77 = vmul.f32 %v73, %v61
  %v78 = vsub.f32 %v62, 0.5
  %v79 = vsub.f32 %v63, 0.5
  %v80 = vsub.f32 %v64, 0.5
  %v81 = vsub.f32 %v65, 0.5
  %v82 = vsel %vm66, %v74, %v78
  %v83 = vsel %vm67, %v75, %v79
  %v84 = vsel %vm68, %v76, %v80
  %v85 = vsel %vm69, %v77, %v81
  %v86 = vmul.f32 %v82, %v16
  %v87 = vmul.f32 %v83, %v16
  %v88 = vmul.f32 %v84, %v16
  %v89 = vmul.f32 %v85, %v16
  %v90 = vmul.f32 %v39, %v16
  %v91 = vrot.slane %v90, 4
  %v92 = vadd.f32 %v90, %v91
  %v93 = vrot.slane %v92, 2
  %v94 = vadd.f32 %v92, %v93
  %v95 = vrot.slane %v94, 1
  %v96 = vadd.f32 %v94, %v95
  %v97 = vmul.f32 %v39, %v18
  %v98 = vrot.slane %v97, 4
  %v99 = vadd.f32 %v97, %v98
  %v100 = vrot.slane %v99, 2
  %v101 = vadd.f32 %v99, %v100
  %v102 = vrot.slane %v101, 1
  %v103 = vadd.f32 %v101, %v102
  %v104 = vrot.slane %v16, 4
  %v105 = vadd.f32 %v16, %v104
  %v106 = vrot.slane %v105, 2
  %v107 = vadd.f32 %v105, %v106
  %v108 = vrot.slane %v107, 1
  %v109 = vadd.f32 %v107, %v108
  %v110 = vrot.slane %v18, 4
  %v111 = vadd.f32 %v18, %v110
  %v112 = vrot.slane %v111, 2
  %v113 = vadd.f32 %v111, %v112
  %v114 = vrot.slane %v113, 1
  %v115 = vadd.f32 %v113, %v114
  %v116 = vrot.slane %v86, 4
  %v117 = vadd.f32 %v86, %v116
  %v118 = vrot.slane %v117, 2
  %v119 = vadd.f32 %v117, %v118
  %v120 = vrot.slane %v119, 1
  %v121 = vadd.f32 %v119, %v120
  %v122 = vrot.slane %v87, 4
  %v123 = vadd.f32 %v87, %v122
  %v124 = vrot.slane %v123, 2
  %v125 = vadd.f32 %v123, %v124
  %v126 = vrot.slane %v125, 1
  %v127 = vadd.f32 %v125, %v126
  %v128 = vrot.slane %v88, 4
  %v129 = vadd.f32 %v88, %v128
  %v130 = vrot.slane %v129, 2
  %v131 = vadd.f32 %v129, %v130
  %v132 = vrot.slane %v131, 1
  %v133 = vadd.f32 %v131, %v132
  %v134 = vrot.slane %v89, 4
  %v135 = vadd.f32 %v89, %v134
  %v136 = vrot.slane %v135, 2
  %v137 = vadd.f32 %v135, %v136
  %v138 = vrot.slane %v137, 1
  %v139 = vadd.f32 %v137, %v138
  %v140 = vrot.slane %v43, 4
  %v141 = vadd.f32 %v43, %v140
  %v142 = vrot.slane %v141, 2
  %v143 = vadd.f32 %v141, %v142
  %v144 = vrot.slane %v143, 1
  %v145 = vadd.f32 %v143, %v144
  %v146 = vrot.slane %v47, 4
  %v147 = vadd.f32 %v47, %v146
  %v148 = vrot.slane %v147, 2
  %v149 = vadd.f32 %v147, %v148
  %v150 = vrot.slane %v149, 1
  %v151 = vadd.f32 %v149, %v150
  %vm156 = vcmask 1045509
  %v157 = vsel %vm156, %v127, %v121
  %vm158 = vcmask 1046534
  %v159 = vsel %vm158, %v133, %v157
  %vm160 = vcmask 1047559
  %v161 = vsel %vm160, %v139, %v159
  %vm163 = vcmask 1040384
  %v164 = vsel %vm163, %v96, %v103
  %vm165 = vcmask 1041408
  %v166 = vsel %vm165, %v164, %v109
  %vm167 = vcmask 1042432
  %v168 = vsel %vm167, %v166, %v115
  %vm169 = vcmask 1043456
  %v170 = vsel %vm169, %v168, %v161
  %v171 = vsel %vm163, %v145, %v151
  %v172 = vsel %vm165, %v171, 0.0
  %173 = vst [vmem:[%s2] sm:$0xff] %v170
  %174 = vst [vmem:[%s2 + $0x8] sm:$0xff] %v172
  // Predicated region
  $region10: #{focal_loss_forward.2} parent=0 // pred_check
    _
  $region11: #{focal_loss_forward.2} parent=0 // pred_check_branch
    %176 = sbr.rel (0) target = $region13
  $region12: #{focal_loss_forward.2} parent=0 // pred_region
    _
  $region13: #{focal_loss_forward.2} parent=0 // pred_fallthru
    _
  // Predicated region
  $region14: #{focal_loss_forward.2} parent=0 // pred_check
    _
  $region15: #{focal_loss_forward.2} parent=0 // pred_check_branch
    %178 = sbr.rel (0) target = $region17
  $region16: #{focal_loss_forward.2} parent=0 // pred_region
    _
  $region17: #{focal_loss_forward.2} parent=0 // pred_fallthru
    _

// kernel: focal_loss_forward.3
$region0: #{focal_loss_forward.3}
  #allocation0 [shape = 'u32[]', space=smem, size = 0x4, offset = 0x4, fixed_abs, tag = 'smem constant byte address 0x4 - core index']
  #allocation1 [shape = 'u32[144,128]{1,0:T(1,128)}', space=vmem, size = 0x12000, scoped, tag = 'internal scratch']
  %s0 = inlined_call_operand.vmem [shape: f32[16,128], index: 0, kind: input, shape index: {}]
  %s1 = inlined_call_operand.vmem [shape: f32[16,128], index: 1, kind: input, shape index: {}]
  %s2 = inlined_call_operand.vmem [shape: f32[8,128], index: 2, kind: output, shape index: {}]
  %s3 = sld [smem:[#allocation0]]
  $region18: #{focal_loss_forward.3} parent=0
    _
  %s5 = ssub.s32 1, %s3
  %s6 = scalar_select 0, %s5, %s3
  // Predicated region
  $region2: #{focal_loss_forward.3} parent=0 // pred_check
    _
  $region3: #{focal_loss_forward.3} parent=0 // pred_check_branch
    %8 = sbr.rel (0) target = $region5
  $region4: #{focal_loss_forward.3} parent=0 // pred_region
    _
  $region5: #{focal_loss_forward.3} parent=0 // pred_fallthru
    _
  // Predicated region
  $region6: #{focal_loss_forward.3} parent=0 // pred_check
    _
  $region7: #{focal_loss_forward.3} parent=0 // pred_check_branch
    %10 = sbr.rel (0) target = $region9
  $region8: #{focal_loss_forward.3} parent=0 // pred_region
    _
  $region9: #{focal_loss_forward.3} parent=0 // pred_fallthru
    _
  %v11 = vld [vmem:[%s1] sm:$0xff]
  %v12 = vld [vmem:[%s1 + $0x8] sm:$0xff]
  %v13 = vld [vmem:[%s0] sm:$0xff]
  %v14 = vld [vmem:[%s0 + $0x8] sm:$0xff]
  %v15 = vsub.f32 %v11, %v13
  %v16 = vsub.f32 %v12, %v14
  %v17 = vmul.f32 %v15, %v15
  %v18 = vmul.f32 %v16, %v16
  %v19 = vadd.f32 %v17, %v18
  %v20 = vrot.slane %v19, 4
  %v21 = vadd.f32 %v19, %v20
  %v22 = vrot.slane %v21, 2
  %v23 = vadd.f32 %v21, %v22
  %v24 = vrot.slane %v23, 1
  %v25 = vadd.f32 %v23, %v24
  %vm26 = vcmask 1040384
  %v27 = vsel %vm26, %v25, 0.0
  %28 = vst [vmem:[%s2] sm:$0xff] %v27
  // Predicated region
  $region10: #{focal_loss_forward.3} parent=0 // pred_check
    _
  $region11: #{focal_loss_forward.3} parent=0 // pred_check_branch
    %30 = sbr.rel (0) target = $region13
  $region12: #{focal_loss_forward.3} parent=0 // pred_region
    _
  $region13: #{focal_loss_forward.3} parent=0 // pred_fallthru
    _
  // Predicated region
  $region14: #{focal_loss_forward.3} parent=0 // pred_check
    _
  $region15: #{focal_loss_forward.3} parent=0 // pred_check_branch
    %32 = sbr.rel (0) target = $region17
  $region16: #{focal_loss_forward.3} parent=0 // pred_region
    _
  $region17: #{focal_loss_forward.3} parent=0 // pred_fallthru
    _

</llo_original>
